<compile_context>
chip_gen: v7x
topology: tpu7x:2x2x1
jax: 0.10.0
libtpu: 0.0.40
codegen_flags: <defaults>
</compile_context>

<pallas_src>
import jax
import jax.numpy as jnp
from jax.experimental import pallas as pl
from jax.experimental.pallas import tpu as pltpu

H1_PAD = 128   # fc1 output 64 -> padded to a full lane width
H2 = 128       # fc2 output (already 128)
OUT_PAD = 128  # fc3 matmul N padded to a full lane width (store is un-padded)


def actor_kernel(ma_ref, x_ref, w1_ref, b1_ref, w2_ref, b2_ref, w3_ref,
                 b3_ref, o_ref):
    max_action = ma_ref[0]  # SMEM scalar (runtime, not baked into the binary)

    # fc1 + relu (bf16 operands, f32 accumulate); x cast bf16 here (VPU op,
    # hidden under the pipeline) instead of a separate wrapper pass.
    x = x_ref[...].astype(w1_ref.dtype)
    h1 = jnp.dot(x, w1_ref[...], preferred_element_type=jnp.float32)
    h1 = jnp.maximum(h1 + b1_ref[...], 0.0)

    # fc2 + relu
    h2 = jnp.dot(h1.astype(w2_ref.dtype), w2_ref[...],
                 preferred_element_type=jnp.float32)
    h2 = jnp.maximum(h2 + b2_ref[...], 0.0)

    # fc3 + sigmoid * max_action (sigmoid -> EUP, essentially free)
    z = jnp.dot(h2.astype(w3_ref.dtype), w3_ref[...],
                preferred_element_type=jnp.float32)
    z = z + b3_ref[...]
    act = jax.nn.sigmoid(z) * max_action

    # Store only the real action lanes (out last dim == full array dim), so
    # HBM writeback is B*action_dim*4 bytes, not B*128*4.
    o_ref[...] = act[:, : o_ref.shape[-1]].astype(o_ref.dtype)


def _round_up(n, m):
    return ((n + m - 1) // m) * m


def _pad_to(a, shape):
    pads = [(0, s - d) for d, s in zip(a.shape, shape)]
    return jnp.pad(a, pads)


def prepare_actor(params, max_action, param_dtype=jnp.bfloat16):
    """One-time pad / bf16-cast of the weights (hoisted out of the hot path)."""
    state_dim = params["w1"].shape[0]
    action_dim = params["w3"].shape[1]
    return {
        "w1": _pad_to(params["w1"], (state_dim, H1_PAD)).astype(param_dtype),
        "b1": _pad_to(params["b1"], (1, H1_PAD)).astype(jnp.float32),
        "w2": _pad_to(params["w2"], (H1_PAD, H2)).astype(param_dtype),
        "b2": _pad_to(params["b2"], (1, H2)).astype(jnp.float32),
        "w3": _pad_to(params["w3"], (H2, OUT_PAD)).astype(param_dtype),
        "b3": _pad_to(params["b3"], (1, OUT_PAD)).astype(jnp.float32),
        "ma": jnp.asarray([max_action], jnp.float32),
        "state_dim": state_dim,
        "action_dim": action_dim,
    }


def actor_forward(x, prepped, *, tile_b=2048):
    """x: (B, state_dim) float32.  prepped: output of prepare_actor()."""
    B, state_dim = x.shape
    assert state_dim == prepped["state_dim"]
    action_dim = prepped["action_dim"]

    # Batch tile: multiple of 8 sublanes; cap at ~ceil(B/2) so the grid keeps
    # >= 2 "parallel" steps when B > 8 (uses both TensorCores on v7x).
    tb = min(tile_b, _round_up(-(-B // 2), 8))
    tb = max(8, _round_up(tb, 8))
    grid = (pl.cdiv(B, tb),)

    flops = 2 * B * (state_dim * H1_PAD + H1_PAD * H2 + H2 * OUT_PAD)
    bytes_accessed = (
        x.size * x.dtype.itemsize
        + (prepped["w1"].size + prepped["w2"].size + prepped["w3"].size) * 2
        + (prepped["b1"].size + prepped["b2"].size + prepped["b3"].size) * 4
        + B * action_dim * 4)

    return pl.pallas_call(
        actor_kernel,
        out_shape=jax.ShapeDtypeStruct((B, action_dim), jnp.float32),
        grid=grid,
        in_specs=[
            pl.BlockSpec(memory_space=pltpu.SMEM),                 # max_action
            pl.BlockSpec((tb, state_dim), lambda i: (i, 0)),       # x tile
            pl.BlockSpec((state_dim, H1_PAD), lambda i: (0, 0)),   # w1 (resident)
            pl.BlockSpec((1, H1_PAD), lambda i: (0, 0)),           # b1
            pl.BlockSpec((H1_PAD, H2), lambda i: (0, 0)),          # w2
            pl.BlockSpec((1, H2), lambda i: (0, 0)),               # b2
            pl.BlockSpec((H2, OUT_PAD), lambda i: (0, 0)),         # w3
            pl.BlockSpec((1, OUT_PAD), lambda i: (0, 0)),          # b3
        ],
        out_specs=pl.BlockSpec((tb, action_dim), lambda i: (i, 0)),
        compiler_params=pltpu.CompilerParams(
            dimension_semantics=("parallel",)),
        cost_estimate=pl.CostEstimate(
            flops=flops, transcendentals=B * OUT_PAD,
            bytes_accessed=bytes_accessed),
    )(prepped["ma"], x, prepped["w1"], prepped["b1"], prepped["w2"],
      prepped["b2"], prepped["w3"], prepped["b3"])


def init_actor_params(key, state_dim, action_dim):
    """Deterministic synthetic init (PyTorch Linear shapes, stored transposed)."""
    k1, k2, k3, k4, k5, k6 = jax.random.split(key, 6)
    # PyTorch Linear weight is (out, in); we store (in, out) for x @ W.
    w1 = jax.random.normal(k1, (state_dim, 64), jnp.float32) * 0.1
    b1 = jax.random.normal(k2, (1, 64), jnp.float32) * 0.1
    w2 = jax.random.normal(k3, (64, 128), jnp.float32) * 0.1
    b2 = jax.random.normal(k4, (1, 128), jnp.float32) * 0.1
    w3 = jax.random.normal(k5, (128, action_dim), jnp.float32) * 0.1
    b3 = jax.random.normal(k6, (1, action_dim), jnp.float32) * 0.1
    return {"w1": w1, "b1": b1, "w2": w2, "b2": b2, "w3": w3, "b3": b3}


def actor_reference(x, params, max_action):
    """Pure-JAX f32 reference matching the PyTorch forward semantics."""
    h1 = jnp.maximum(x @ params["w1"] + params["b1"], 0.0)
    h2 = jnp.maximum(h1 @ params["w2"] + params["b2"], 0.0)
    z = h2 @ params["w3"] + params["b3"]
    return jax.nn.sigmoid(z) * max_action


if __name__ == "__main__":
    key = jax.random.PRNGKey(0)
    kx, kp, kx2 = jax.random.split(key, 3)

    state_dim = 16
    action_dim = 8
    max_action = 2.0
    params = init_actor_params(kp, state_dim, action_dim)
    prepped = prepare_actor(params, max_action)   # one-time, out of hot path

    # Small batch (single grid step, exact tile).
    batch = 8
    x = jax.random.normal(kx, (batch, state_dim), jnp.float32)
    out = jax.block_until_ready(actor_forward(x, prepped))
    ref = actor_reference(x, params, max_action)
    assert out.shape == (batch, action_dim)
    # bf16 matmul operands vs f32 reference -> loose tolerance.
    assert jnp.allclose(out, ref, atol=2e-2, rtol=2e-2), (
        float(jnp.max(jnp.abs(out - ref))))

    # Larger, non-tile-aligned batch: exercises the 2-step parallel grid and
    # the partial final block (no wrapper-side row padding).
    batch2 = 300
    x2 = jax.random.normal(kx2, (batch2, state_dim), jnp.float32)
    out2 = jax.block_until_ready(actor_forward(x2, prepped))
    ref2 = actor_reference(x2, params, max_action)
    assert out2.shape == (batch2, action_dim)
    assert jnp.allclose(out2, ref2, atol=2e-2, rtol=2e-2), (
        float(jnp.max(jnp.abs(out2 - ref2))))

    print("KERNEL_OK")
</pallas_src>

<mosaic_0001>
module attributes {stable_mosaic.version = 11 : i64} {
  func.func @actor_kernel(%arg0: i32, %arg1: memref<1xf32, #tpu.memory_space<smem>>, %arg2: memref<8x16xf32, #tpu.memory_space<vmem>>, %arg3: memref<16x128xbf16, #tpu.memory_space<vmem>>, %arg4: memref<1x128xf32, #tpu.memory_space<vmem>>, %arg5: memref<128x128xbf16, #tpu.memory_space<vmem>>, %arg6: memref<1x128xf32, #tpu.memory_space<vmem>>, %arg7: memref<128x128xbf16, #tpu.memory_space<vmem>>, %arg8: memref<1x128xf32, #tpu.memory_space<vmem>>, %arg9: memref<8x8xf32, #tpu.memory_space<vmem>>) attributes {dimension_semantics = [#tpu.dimension_semantics<parallel>], iteration_bounds = array<i64: 1>, scalar_prefetch = 0 : i64, scratch_operands = 0 : i64, tpu.core_type = #tpu.core_type<tc>, window_params = [{transform_indices = @transform_0, window_bounds = array<i64: 1>}, {transform_indices = @transform_1, window_bounds = array<i64: 8, 16>}, {pipeline_mode = #tpu.pipeline_mode<synchronous>, transform_indices = @transform_2, window_bounds = array<i64: 16, 128>}, {pipeline_mode = #tpu.pipeline_mode<synchronous>, transform_indices = @transform_3, window_bounds = array<i64: 1, 128>}, {pipeline_mode = #tpu.pipeline_mode<synchronous>, transform_indices = @transform_4, window_bounds = array<i64: 128, 128>}, {pipeline_mode = #tpu.pipeline_mode<synchronous>, transform_indices = @transform_5, window_bounds = array<i64: 1, 128>}, {pipeline_mode = #tpu.pipeline_mode<synchronous>, transform_indices = @transform_6, window_bounds = array<i64: 128, 128>}, {pipeline_mode = #tpu.pipeline_mode<synchronous>, transform_indices = @transform_7, window_bounds = array<i64: 1, 128>}, {transform_indices = @transform_8, window_bounds = array<i64: 8, 8>}]} {
    %c0 = arith.constant 0 : index
    %0 = memref.load %arg1[%c0] : memref<1xf32, #tpu.memory_space<smem>>
    %c0_0 = arith.constant 0 : index
    %c0_1 = arith.constant 0 : index
    %1 = vector.load %arg2[%c0_0, %c0_1] : memref<8x16xf32, #tpu.memory_space<vmem>>, vector<8x16xf32>
    %2 = arith.truncf %1 : vector<8x16xf32> to vector<8x16xbf16>
    %c0_2 = arith.constant 0 : index
    %c0_3 = arith.constant 0 : index
    %3 = vector.load %arg3[%c0_2, %c0_3] : memref<16x128xbf16, #tpu.memory_space<vmem>>, vector<16x128xbf16>
    %cst = arith.constant dense<0.000000e+00> : vector<8x128xf32>
    %4 = tpu.matmul %2, %3, %cst {dimension_numbers = #tpu.dot_dimension_numbers<[1], [0], [0], [1], [0, 0, 1, 1], [], []>} : vector<8x16xbf16>, vector<16x128xbf16>, vector<8x128xf32> -> vector<8x128xf32>
    %c0_4 = arith.constant 0 : index
    %c0_5 = arith.constant 0 : index
    %5 = vector.load %arg4[%c0_4, %c0_5] : memref<1x128xf32, #tpu.memory_space<vmem>>, vector<1x128xf32>
    %6 = vector.broadcast %5 : vector<1x128xf32> to vector<8x128xf32>
    %7 = arith.addf %4, %6 : vector<8x128xf32>
    %cst_6 = arith.constant 0.000000e+00 : f32
    %8 = vector.broadcast %cst_6 : f32 to vector<8x128xf32>
    %9 = arith.maximumf %7, %8 : vector<8x128xf32>
    %10 = arith.truncf %9 : vector<8x128xf32> to vector<8x128xbf16>
    %c0_7 = arith.constant 0 : index
    %c0_8 = arith.constant 0 : index
    %11 = vector.load %arg5[%c0_7, %c0_8] : memref<128x128xbf16, #tpu.memory_space<vmem>>, vector<128x128xbf16>
    %cst_9 = arith.constant dense<0.000000e+00> : vector<8x128xf32>
    %12 = tpu.matmul %10, %11, %cst_9 {dimension_numbers = #tpu.dot_dimension_numbers<[1], [0], [0], [1], [0, 0, 1, 1], [], []>} : vector<8x128xbf16>, vector<128x128xbf16>, vector<8x128xf32> -> vector<8x128xf32>
    %c0_10 = arith.constant 0 : index
    %c0_11 = arith.constant 0 : index
    %13 = vector.load %arg6[%c0_10, %c0_11] : memref<1x128xf32, #tpu.memory_space<vmem>>, vector<1x128xf32>
    %14 = vector.broadcast %13 : vector<1x128xf32> to vector<8x128xf32>
    %15 = arith.addf %12, %14 : vector<8x128xf32>
    %cst_12 = arith.constant 0.000000e+00 : f32
    %16 = vector.broadcast %cst_12 : f32 to vector<8x128xf32>
    %17 = arith.maximumf %15, %16 : vector<8x128xf32>
    %18 = arith.truncf %17 : vector<8x128xf32> to vector<8x128xbf16>
    %c0_13 = arith.constant 0 : index
    %c0_14 = arith.constant 0 : index
    %19 = vector.load %arg7[%c0_13, %c0_14] : memref<128x128xbf16, #tpu.memory_space<vmem>>, vector<128x128xbf16>
    %cst_15 = arith.constant dense<0.000000e+00> : vector<8x128xf32>
    %20 = tpu.matmul %18, %19, %cst_15 {dimension_numbers = #tpu.dot_dimension_numbers<[1], [0], [0], [1], [0, 0, 1, 1], [], []>} : vector<8x128xbf16>, vector<128x128xbf16>, vector<8x128xf32> -> vector<8x128xf32>
    %c0_16 = arith.constant 0 : index
    %c0_17 = arith.constant 0 : index
    %21 = vector.load %arg8[%c0_16, %c0_17] : memref<1x128xf32, #tpu.memory_space<vmem>>, vector<1x128xf32>
    %22 = vector.broadcast %21 : vector<1x128xf32> to vector<8x128xf32>
    %23 = arith.addf %20, %22 : vector<8x128xf32>
    %24 = arith.negf %23 : vector<8x128xf32>
    %25 = math.exp %24 : vector<8x128xf32>
    %cst_18 = arith.constant 1.000000e+00 : f32
    %26 = vector.broadcast %cst_18 : f32 to vector<8x128xf32>
    %27 = arith.addf %26, %25 : vector<8x128xf32>
    %28 = arith.divf %26, %27 : vector<8x128xf32>
    %29 = vector.broadcast %0 : f32 to vector<8x128xf32>
    %30 = arith.mulf %28, %29 : vector<8x128xf32>
    %31 = vector.extract_strided_slice %30 {offsets = [0, 0], sizes = [8, 8], strides = [1, 1]} : vector<8x128xf32> to vector<8x8xf32>
    %c0_19 = arith.constant 0 : index
    %c0_20 = arith.constant 0 : index
    %32 = vector.load %arg9[%c0_19, %c0_20] : memref<8x8xf32, #tpu.memory_space<vmem>>, vector<8x8xf32>
    tpu.vector_store %arg9[%c0_19, %c0_20], %31 {strides = array<i32>} : memref<8x8xf32, #tpu.memory_space<vmem>>, vector<8x8xf32>,
    return
  }
  func.func @transform_0(%arg0: i32) -> i32 {
    %c0_i32 = arith.constant 0 : i32
    %c0_i32_0 = arith.constant 0 : i32
    return %c0_i32 : i32
  }
  func.func @transform_1(%arg0: i32) -> (i32, i32) {
    %c0_i32 = arith.constant 0 : i32
    %c0_i32_0 = arith.constant 0 : i32
    return %arg0, %c0_i32 : i32, i32
  }
  func.func @transform_2(%arg0: i32) -> (i32, i32) {
    %c0_i32 = arith.constant 0 : i32
    %c0_i32_0 = arith.constant 0 : i32
    %c0_i32_1 = arith.constant 0 : i32
    return %c0_i32, %c0_i32_0 : i32, i32
  }
  func.func @transform_3(%arg0: i32) -> (i32, i32) {
    %c0_i32 = arith.constant 0 : i32
    %c0_i32_0 = arith.constant 0 : i32
    %c0_i32_1 = arith.constant 0 : i32
    return %c0_i32, %c0_i32_0 : i32, i32
  }
  func.func @transform_4(%arg0: i32) -> (i32, i32) {
    %c0_i32 = arith.constant 0 : i32
    %c0_i32_0 = arith.constant 0 : i32
    %c0_i32_1 = arith.constant 0 : i32
    return %c0_i32, %c0_i32_0 : i32, i32
  }
  func.func @transform_5(%arg0: i32) -> (i32, i32) {
    %c0_i32 = arith.constant 0 : i32
    %c0_i32_0 = arith.constant 0 : i32
    %c0_i32_1 = arith.constant 0 : i32
    return %c0_i32, %c0_i32_0 : i32, i32
  }
  func.func @transform_6(%arg0: i32) -> (i32, i32) {
    %c0_i32 = arith.constant 0 : i32
    %c0_i32_0 = arith.constant 0 : i32
    %c0_i32_1 = arith.constant 0 : i32
    return %c0_i32, %c0_i32_0 : i32, i32
  }
  func.func @transform_7(%arg0: i32) -> (i32, i32) {
    %c0_i32 = arith.constant 0 : i32
    %c0_i32_0 = arith.constant 0 : i32
    %c0_i32_1 = arith.constant 0 : i32
    return %c0_i32, %c0_i32_0 : i32, i32
  }
  func.func @transform_8(%arg0: i32) -> (i32, i32) {
    %c0_i32 = arith.constant 0 : i32
    %c0_i32_0 = arith.constant 0 : i32
    return %arg0, %c0_i32 : i32, i32
  }
}

</mosaic_0001>

<llo_original>
// kernel: tpu_custom_call.1
$region0: #{tpu_custom_call.1}
  #allocation0 [shape = 'u32[]', space=smem, size = 0x4, offset = 0x4, fixed_abs, tag = 'smem constant byte address 0x4 - core index']
  #allocation1 [shape = 'u32[144,128]{1,0:T(1,128)}', space=vmem, size = 0x12000, scoped, tag = 'internal scratch']
  #allocation2 [shape = 'f32[1]{0:T(128)S(6)}', space=smem, size = 0x200, scoped, tag = 'scoped memory for tpu_custom_call.1']
  %s0 = inlined_call_operand.<no memory space> [shape: f32[1], index: 0, kind: input, shape index: {}]
  %s1 = inlined_call_operand.hbm [shape: f32[8,16], index: 1, kind: input, shape index: {}]
  %s2 = inlined_call_operand.hbm [shape: bf16[16,128], index: 2, kind: input, shape index: {}]
  %s3 = inlined_call_operand.vmem [shape: f32[1,128], index: 3, kind: input, shape index: {}]
  %s4 = inlined_call_operand.hbm [shape: bf16[128,128], index: 4, kind: input, shape index: {}]
  %s5 = inlined_call_operand.vmem [shape: f32[1,128], index: 5, kind: input, shape index: {}]
  %s6 = inlined_call_operand.hbm [shape: bf16[128,128], index: 6, kind: input, shape index: {}]
  %s7 = inlined_call_operand.vmem [shape: f32[1,128], index: 7, kind: input, shape index: {}]
  %s8 = inlined_call_operand.hbm [shape: f32[8,8], index: 8, kind: output, shape index: {}]
  %s9 = sld [smem:[#allocation0]]
  $region58: #{tpu_custom_call.1} parent=0
    _
  %s11 = ssub.s32 1, %s9
  %s12 = scalar_select 0, %s11, %s9
  %13 = sst [smem:[#allocation2]] %s0
  $region1: #{tpu_custom_call.1} parent=0
    #allocation3 [shape = 'u8[4096]{0}', space=vmem, size = 0x1000, scoped, tag = 'input window, operand 1, single buffered']
    #allocation4 [shape = 's32[1]{0}', space=sflag, size = 0x4, scoped, tag = 'scoped memory for tpu_custom_call.1']
    #allocation5 [shape = 's32[1]{0}', space=sflag, size = 0x4, scoped, tag = 'scoped memory for tpu_custom_call.1']
    #allocation6 [shape = 'u8[4096]{0}', space=vmem, size = 0x1000, scoped, tag = 'input window, operand 2, single buffered']
    #allocation7 [shape = 's32[1]{0}', space=sflag, size = 0x4, scoped, tag = 'scoped memory for tpu_custom_call.1']
    #allocation8 [shape = 'u8[32768]{0}', space=vmem, size = 0x8000, scoped, tag = 'input window, operand 4, single buffered']
    #allocation9 [shape = 'u8[32768]{0}', space=vmem, size = 0x8000, scoped, tag = 'input window, operand 6, single buffered']
    #allocation10 [shape = 's32[1]{0}', space=sflag, size = 0x4, scoped, tag = 'scoped memory for tpu_custom_call.1']
    #allocation11 [shape = 'u8[4096]{0}', space=vmem, size = 0x1000, scoped, tag = 'output window, operand 0, single buffered']
    %14 = vsyncpa [#allocation4], 0
    %15 = vsyncpa [#allocation7], 0
    %16 = vsyncpa [#allocation10], 0
    %17 = vsyncpa [#allocation5], 0
    // Predicated region
    $region2: #{tpu_custom_call.1} parent=1 // pred_check
      _
    $region3: #{tpu_custom_call.1} parent=1 // pred_check_branch
      %19 = sbr.rel (0) target = $region5
    $region4: #{tpu_custom_call.1} parent=1 // pred_region
      _
    $region5: #{tpu_custom_call.1} parent=1 // pred_fallthru
      _
    // Predicated region
    $region6: #{tpu_custom_call.1} parent=1 // pred_check
      _
    $region7: #{tpu_custom_call.1} parent=1 // pred_check_branch
      %21 = sbr.rel (0) target = $region9
    $region8: #{tpu_custom_call.1} parent=1 // pred_region
      %s23 = ssub.s32 128, 128
      %24 = vsyncadd [#allocation4], %s23
      %s26 = sshll.u32 [#allocation3], 4
      %s27 = int_to_ptr.vmem [resolvable:$true] %s26
      %29 = dma.hbm_to_vmem [thread:$0]  %s1, 128, %s27, [#allocation4]
    $region9: #{tpu_custom_call.1} parent=1 // pred_fallthru
      _
    // Predicated region
    $region10: #{tpu_custom_call.1} parent=1 // pred_check
      _
    $region11: #{tpu_custom_call.1} parent=1 // pred_check_branch
      %31 = sbr.rel (0) target = $region13
    $region12: #{tpu_custom_call.1} parent=1 // pred_region
      %s33 = ssub.s32 128, 128
      %34 = vsyncadd [#allocation7], %s33
      %s35 = sshll.u32 [#allocation6], 4
      %s36 = int_to_ptr.vmem [resolvable:$true] %s35
      %41 = dma.hbm_to_vmem [thread:$0]  %s2, 128, %s36, [#allocation7], 64, 64, 4
    $region13: #{tpu_custom_call.1} parent=1 // pred_fallthru
      _
    // Predicated region
    $region14: #{tpu_custom_call.1} parent=1 // pred_check
      _
    $region15: #{tpu_custom_call.1} parent=1 // pred_check_branch
      %43 = sbr.rel (0) target = $region17
    $region16: #{tpu_custom_call.1} parent=1 // pred_region
      _
    $region17: #{tpu_custom_call.1} parent=1 // pred_fallthru
      _
    // Predicated region
    $region18: #{tpu_custom_call.1} parent=1 // pred_check
      _
    $region19: #{tpu_custom_call.1} parent=1 // pred_check_branch
      %45 = sbr.rel (0) target = $region21
    $region20: #{tpu_custom_call.1} parent=1 // pred_region
      %s47 = ssub.s32 1024, 1024
      %48 = vsyncadd [#allocation7], %s47
      %s49 = sshll.u32 [#allocation8], 4
      %s50 = int_to_ptr.vmem [resolvable:$true] %s49
      %55 = dma.hbm_to_vmem [thread:$0]  %s4, 1024, %s50, [#allocation7], 64, 64, 4
    $region21: #{tpu_custom_call.1} parent=1 // pred_fallthru
      _
    // Predicated region
    $region22: #{tpu_custom_call.1} parent=1 // pred_check
      _
    $region23: #{tpu_custom_call.1} parent=1 // pred_check_branch
      %57 = sbr.rel (0) target = $region25
    $region24: #{tpu_custom_call.1} parent=1 // pred_region
      _
    $region25: #{tpu_custom_call.1} parent=1 // pred_fallthru
      _
    // Predicated region
    $region26: #{tpu_custom_call.1} parent=1 // pred_check
      _
    $region27: #{tpu_custom_call.1} parent=1 // pred_check_branch
      %59 = sbr.rel (0) target = $region29
    $region28: #{tpu_custom_call.1} parent=1 // pred_region
      %s61 = ssub.s32 1024, 1024
      %62 = vsyncadd [#allocation10], %s61
      %s63 = sshll.u32 [#allocation9], 4
      %s64 = int_to_ptr.vmem [resolvable:$true] %s63
      %69 = dma.hbm_to_vmem [thread:$0]  %s6, 1024, %s64, [#allocation10], 64, 64, 4
    $region29: #{tpu_custom_call.1} parent=1 // pred_fallthru
      _
    // Predicated region
    $region30: #{tpu_custom_call.1} parent=1 // pred_check
      _
    $region31: #{tpu_custom_call.1} parent=1 // pred_check_branch
      %71 = sbr.rel (0) target = $region33
    $region32: #{tpu_custom_call.1} parent=1 // pred_region
      _
    $region33: #{tpu_custom_call.1} parent=1 // pred_fallthru
      _
    // Predicated region
    $region34: #{tpu_custom_call.1} parent=1 // pred_check
      _
    $region35: #{tpu_custom_call.1} parent=1 // pred_check_branch
      %73 = sbr.rel (0) target = $region37
    $region36: #{tpu_custom_call.1} parent=1 // pred_region
      %74 = dma.done [#allocation4], 128
    $region37: #{tpu_custom_call.1} parent=1 // pred_fallthru
      _
    // Predicated region
    $region38: #{tpu_custom_call.1} parent=1 // pred_check
      _
    $region39: #{tpu_custom_call.1} parent=1 // pred_check_branch
      %76 = sbr.rel (0) target = $region41
    $region40: #{tpu_custom_call.1} parent=1 // pred_region
      %77 = dma.done [#allocation7], 128
    $region41: #{tpu_custom_call.1} parent=1 // pred_fallthru
      _
    // Predicated region
    $region42: #{tpu_custom_call.1} parent=1 // pred_check
      _
    $region43: #{tpu_custom_call.1} parent=1 // pred_check_branch
      %79 = sbr.rel (0) target = $region45
    $region44: #{tpu_custom_call.1} parent=1 // pred_region
      %80 = dma.done [#allocation7], 1024
    $region45: #{tpu_custom_call.1} parent=1 // pred_fallthru
      _
    // Predicated region
    $region46: #{tpu_custom_call.1} parent=1 // pred_check
      _
    $region47: #{tpu_custom_call.1} parent=1 // pred_check_branch
      %82 = sbr.rel (0) target = $region49
    $region48: #{tpu_custom_call.1} parent=1 // pred_region
      %83 = dma.done [#allocation10], 1024
    $region49: #{tpu_custom_call.1} parent=1 // pred_fallthru
      _
    %s85 = sld [smem:[#allocation2]]
    %v86 = vld [vmem:[#allocation3] sm:$0xff]
    %v87 = vpack.c.bf16 %v86, %v86
    %v88 = vld [vmem:[#allocation6] sm:$0xf]
    %v89 = vld [vmem:[#allocation6 + $0x4] sm:$0xf]
    %v90 = vld [vmem:[%s3] sm:$0x1]
    %v92 = vlaneseq
    %v93 = vshrl.u32 %v92, 7
    %v94 = vsub.s32 0, %v93
    %v95 = vrot.slane %v90, %v94
    %v99 = vunpack.c.l.b16 %v88
    %v100 = vunpack.c.l.b16 %v89
    %v101 = vpack.c.b16 %v100, %v99
    %vm103 = vcmask 130048
    %v105 = vsel %vm103, %v87, 0
    %107 = vmatprep.subr.bf16.mxu0 0
    %108 = vmatpush1.bf16.msra.mxu0 %v101
    %109 = vmatprep.subr.bf16.mxu0 0
    %110 = vmatpush1.bf16.msra.mxu0 0
    %111 = vmatprep.subr.bf16.mxu0 0
    %112 = vmatpush1.bf16.msra.mxu0 0
    %113 = vmatprep.subr.bf16.mxu0 0
    %114 = vmatpush1.bf16.msra.mxu0 0
    %115 = vmatprep.subr.bf16.mxu0 0
    %116 = vmatpush1.bf16.msra.mxu0 0
    %117 = vmatprep.subr.bf16.mxu0 0
    %118 = vmatpush1.bf16.msra.mxu0 0
    %119 = vmatprep.subr.bf16.mxu0 0
    %120 = vmatpush1.bf16.msra.mxu0 0
    %121 = vmatprep.subr.bf16.mxu0 0
    %122 = vmatpush1.bf16.msra.mxu0 0
    %123 = vmatprep.subr.bf16.mxu0 0
    %124 = vmatpush1.bf16.msra.mxu0 0
    %125 = vmatprep.subr.bf16.mxu0 0
    %126 = vmatpush1.bf16.msra.mxu0 0
    %127 = vmatprep.subr.bf16.mxu0 0
    %128 = vmatpush1.bf16.msra.mxu0 0
    %129 = vmatprep.subr.bf16.mxu0 0
    %130 = vmatpush1.bf16.msra.mxu0 0
    %131 = vmatprep.subr.bf16.mxu0 0
    %132 = vmatpush1.bf16.msra.mxu0 0
    %133 = vmatprep.subr.bf16.mxu0 0
    %134 = vmatpush1.bf16.msra.mxu0 0
    %135 = vmatprep.subr.bf16.mxu0 0
    %136 = vmatpush1.bf16.msra.mxu0 0
    %137 = vmatprep.subr.bf16.mxu0 0
    %138 = vmatpush1.bf16.msra.mxu0 0
    %139 = vmatprep.mubr.bf16.mxu0 0
    %140 = vmatmul.mubr.bf16.gmra.mrb[0].mxu0 %v105
    %v141 = vpop.f32.mrb[0].mxu0
    %v142 = vadd.f32 %v95, %v141
    %v143 = vpop.f32.mrb[0].mxu0
    %v144 = vpop.f32.mrb[0].mxu0
    %v145 = vpop.f32.mrb[0].mxu0
    %146 = vdwg.mxu0
    %v147 = vmax.f32 %v142, 0.0
    %v148 = vpack.c.bf16 %v147, %v147
    %v149 = vld [vmem:[#allocation8] sm:$0xf]
    %v150 = vld [vmem:[#allocation8 + $0x4] sm:$0xf]
    %v151 = vld [vmem:[#allocation8 + $0x8] sm:$0xf]
    %v152 = vld [vmem:[#allocation8 + $0xc] sm:$0xf]
    %v153 = vld [vmem:[#allocation8 + $0x10] sm:$0xf]
    %v154 = vld [vmem:[#allocation8 + $0x14] sm:$0xf]
    %v155 = vld [vmem:[#allocation8 + $0x18] sm:$0xf]
    %v156 = vld [vmem:[#allocation8 + $0x1c] sm:$0xf]
    %v157 = vld [vmem:[#allocation8 + $0x20] sm:$0xf]
    %v158 = vld [vmem:[#allocation8 + $0x24] sm:$0xf]
    %v159 = vld [vmem:[#allocation8 + $0x28] sm:$0xf]
    %v160 = vld [vmem:[#allocation8 + $0x2c] sm:$0xf]
    %v161 = vld [vmem:[#allocation8 + $0x30] sm:$0xf]
    %v162 = vld [vmem:[#allocation8 + $0x34] sm:$0xf]
    %v163 = vld [vmem:[#allocation8 + $0x38] sm:$0xf]
    %v164 = vld [vmem:[#allocation8 + $0x3c] sm:$0xf]
    %v165 = vld [vmem:[%s5] sm:$0x1]
    %v167 = vlaneseq
    %v168 = vshrl.u32 %v167, 7
    %v169 = vsub.s32 0, %v168
    %v170 = vrot.slane %v165, %v169
    %v188 = vunpack.c.l.b16 %v149
    %v189 = vunpack.c.l.b16 %v150
    %v190 = vunpack.c.l.b16 %v151
    %v191 = vunpack.c.l.b16 %v152
    %v192 = vunpack.c.l.b16 %v153
    %v193 = vunpack.c.l.b16 %v154
    %v194 = vunpack.c.l.b16 %v155
    %v195 = vunpack.c.l.b16 %v156
    %v196 = vunpack.c.l.b16 %v157
    %v197 = vunpack.c.l.b16 %v158
    %v198 = vunpack.c.l.b16 %v159
    %v199 = vunpack.c.l.b16 %v160
    %v200 = vunpack.c.l.b16 %v161
    %v201 = vunpack.c.l.b16 %v162
    %v202 = vunpack.c.l.b16 %v163
    %v203 = vunpack.c.l.b16 %v164
    %v204 = vpack.c.b16 %v189, %v188
    %v205 = vpack.c.b16 %v191, %v190
    %v206 = vpack.c.b16 %v193, %v192
    %v207 = vpack.c.b16 %v195, %v194
    %v208 = vpack.c.b16 %v197, %v196
    %v209 = vpack.c.b16 %v199, %v198
    %v210 = vpack.c.b16 %v201, %v200
    %v211 = vpack.c.b16 %v203, %v202
    %220 = vmatprep.subr.bf16.mxu0 0
    %221 = vmatpush1.bf16.msra.mxu0 %v204
    %222 = vmatprep.subr.bf16.mxu0 0
    %223 = vmatpush1.bf16.msra.mxu0 %v205
    %224 = vmatprep.subr.bf16.mxu0 0
    %225 = vmatpush1.bf16.msra.mxu0 %v206
    %226 = vmatprep.subr.bf16.mxu0 0
    %227 = vmatpush1.bf16.msra.mxu0 %v207
    %228 = vmatprep.subr.bf16.mxu0 0
    %229 = vmatpush1.bf16.msra.mxu0 %v208
    %230 = vmatprep.subr.bf16.mxu0 0
    %231 = vmatpush1.bf16.msra.mxu0 %v209
    %232 = vmatprep.subr.bf16.mxu0 0
    %233 = vmatpush1.bf16.msra.mxu0 %v210
    %234 = vmatprep.subr.bf16.mxu0 0
    %235 = vmatpush1.bf16.msra.mxu0 %v211
    %236 = vmatprep.subr.bf16.mxu0 0
    %237 = vmatpush1.bf16.msra.mxu0 0
    %238 = vmatprep.subr.bf16.mxu0 0
    %239 = vmatpush1.bf16.msra.mxu0 0
    %240 = vmatprep.subr.bf16.mxu0 0
    %241 = vmatpush1.bf16.msra.mxu0 0
    %242 = vmatprep.subr.bf16.mxu0 0
    %243 = vmatpush1.bf16.msra.mxu0 0
    %244 = vmatprep.subr.bf16.mxu0 0
    %245 = vmatpush1.bf16.msra.mxu0 0
    %246 = vmatprep.subr.bf16.mxu0 0
    %247 = vmatpush1.bf16.msra.mxu0 0
    %248 = vmatprep.subr.bf16.mxu0 0
    %249 = vmatpush1.bf16.msra.mxu0 0
    %250 = vmatprep.subr.bf16.mxu0 0
    %251 = vmatpush1.bf16.msra.mxu0 0
    %252 = vmatprep.mubr.bf16.mxu0 0
    %253 = vmatmul.mubr.bf16.gmra.mrb[0].mxu0 %v148
    %v254 = vpop.f32.mrb[0].mxu0
    %v255 = vadd.f32 %v170, %v254
    %v256 = vpop.f32.mrb[0].mxu0
    %v257 = vpop.f32.mrb[0].mxu0
    %v258 = vpop.f32.mrb[0].mxu0
    %259 = vdwg.mxu0
    %v260 = vmax.f32 %v255, 0.0
    %v261 = vpack.c.bf16 %v260, %v260
    %v262 = vld [vmem:[#allocation9] sm:$0xf]
    %v263 = vld [vmem:[#allocation9 + $0x4] sm:$0xf]
    %v264 = vld [vmem:[#allocation9 + $0x8] sm:$0xf]
    %v265 = vld [vmem:[#allocation9 + $0xc] sm:$0xf]
    %v266 = vld [vmem:[#allocation9 + $0x10] sm:$0xf]
    %v267 = vld [vmem:[#allocation9 + $0x14] sm:$0xf]
    %v268 = vld [vmem:[#allocation9 + $0x18] sm:$0xf]
    %v269 = vld [vmem:[#allocation9 + $0x1c] sm:$0xf]
    %v270 = vld [vmem:[#allocation9 + $0x20] sm:$0xf]
    %v271 = vld [vmem:[#allocation9 + $0x24] sm:$0xf]
    %v272 = vld [vmem:[#allocation9 + $0x28] sm:$0xf]
    %v273 = vld [vmem:[#allocation9 + $0x2c] sm:$0xf]
    %v274 = vld [vmem:[#allocation9 + $0x30] sm:$0xf]
    %v275 = vld [vmem:[#allocation9 + $0x34] sm:$0xf]
    %v276 = vld [vmem:[#allocation9 + $0x38] sm:$0xf]
    %v277 = vld [vmem:[#allocation9 + $0x3c] sm:$0xf]
    %v278 = vld [vmem:[%s7] sm:$0x1]
    %v280 = vlaneseq
    %v281 = vshrl.u32 %v280, 7
    %v282 = vsub.s32 0, %v281
    %v283 = vrot.slane %v278, %v282
    %v301 = vunpack.c.l.b16 %v262
    %v302 = vunpack.c.l.b16 %v263
    %v303 = vunpack.c.l.b16 %v264
    %v304 = vunpack.c.l.b16 %v265
    %v305 = vunpack.c.l.b16 %v266
    %v306 = vunpack.c.l.b16 %v267
    %v307 = vunpack.c.l.b16 %v268
    %v308 = vunpack.c.l.b16 %v269
    %v309 = vunpack.c.l.b16 %v270
    %v310 = vunpack.c.l.b16 %v271
    %v311 = vunpack.c.l.b16 %v272
    %v312 = vunpack.c.l.b16 %v273
    %v313 = vunpack.c.l.b16 %v274
    %v314 = vunpack.c.l.b16 %v275
    %v315 = vunpack.c.l.b16 %v276
    %v316 = vunpack.c.l.b16 %v277
    %v317 = vpack.c.b16 %v302, %v301
    %v318 = vpack.c.b16 %v304, %v303
    %v319 = vpack.c.b16 %v306, %v305
    %v320 = vpack.c.b16 %v308, %v307
    %v321 = vpack.c.b16 %v310, %v309
    %v322 = vpack.c.b16 %v312, %v311
    %v323 = vpack.c.b16 %v314, %v313
    %v324 = vpack.c.b16 %v316, %v315
    %333 = vmatprep.subr.bf16.mxu0 0
    %334 = vmatpush1.bf16.msra.mxu0 %v317
    %335 = vmatprep.subr.bf16.mxu0 0
    %336 = vmatpush1.bf16.msra.mxu0 %v318
    %337 = vmatprep.subr.bf16.mxu0 0
    %338 = vmatpush1.bf16.msra.mxu0 %v319
    %339 = vmatprep.subr.bf16.mxu0 0
    %340 = vmatpush1.bf16.msra.mxu0 %v320
    %341 = vmatprep.subr.bf16.mxu0 0
    %342 = vmatpush1.bf16.msra.mxu0 %v321
    %343 = vmatprep.subr.bf16.mxu0 0
    %344 = vmatpush1.bf16.msra.mxu0 %v322
    %345 = vmatprep.subr.bf16.mxu0 0
    %346 = vmatpush1.bf16.msra.mxu0 %v323
    %347 = vmatprep.subr.bf16.mxu0 0
    %348 = vmatpush1.bf16.msra.mxu0 %v324
    %349 = vmatprep.subr.bf16.mxu0 0
    %350 = vmatpush1.bf16.msra.mxu0 0
    %351 = vmatprep.subr.bf16.mxu0 0
    %352 = vmatpush1.bf16.msra.mxu0 0
    %353 = vmatprep.subr.bf16.mxu0 0
    %354 = vmatpush1.bf16.msra.mxu0 0
    %355 = vmatprep.subr.bf16.mxu0 0
    %356 = vmatpush1.bf16.msra.mxu0 0
    %357 = vmatprep.subr.bf16.mxu0 0
    %358 = vmatpush1.bf16.msra.mxu0 0
    %359 = vmatprep.subr.bf16.mxu0 0
    %360 = vmatpush1.bf16.msra.mxu0 0
    %361 = vmatprep.subr.bf16.mxu0 0
    %362 = vmatpush1.bf16.msra.mxu0 0
    %363 = vmatprep.subr.bf16.mxu0 0
    %364 = vmatpush1.bf16.msra.mxu0 0
    %365 = vmatprep.mubr.bf16.mxu0 0
    %366 = vmatmul.mubr.bf16.gmra.mrb[0].mxu0 %v261
    %v367 = vpop.f32.mrb[0].mxu0
    %v368 = vadd.f32 %v283, %v367
    %v369 = vpop.f32.mrb[0].mxu0
    %v370 = vpop.f32.mrb[0].mxu0
    %v371 = vpop.f32.mrb[0].mxu0
    %372 = vdwg.mxu0
    %v373 = vxor.u32 %v368, 2147483648
    %v374 = vmul.f32 %v373, 1.442695
    %v375 = vpow.pop %v374
    %v376 = vadd.f32 %v375, 1.0
    %v377 = vrcp.pop %v376
    %v378 = vmul.f32 1.0, %v377
    %v379 = vstv %s85
    %v380 = vmul.f32 %v378, %v379
    %vm381 = vcmask 64512
    %382 = vst.msk [vmem:[#allocation11] sm:$0xff] %vm381, %v380
    // Predicated region
    $region50: #{tpu_custom_call.1} parent=1 // pred_check
      _
    $region51: #{tpu_custom_call.1} parent=1 // pred_check_branch
      %384 = sbr.rel (0) target = $region53
    $region52: #{tpu_custom_call.1} parent=1 // pred_region
      %s386 = ssub.s32 128, 128
      %387 = vsyncadd [#allocation5], %s386
      %s389 = sshll.u32 [#allocation11], 4
      %s390 = int_to_ptr.vmem [resolvable:$true] %s389
      %392 = dma.vmem_to_hbm [thread:$0]  %s390, 128, %s8, [#allocation5]
    $region53: #{tpu_custom_call.1} parent=1 // pred_fallthru
      _
    // Predicated region
    $region54: #{tpu_custom_call.1} parent=1 // pred_check
      _
    $region55: #{tpu_custom_call.1} parent=1 // pred_check_branch
      %394 = sbr.rel (0) target = $region57
    $region56: #{tpu_custom_call.1} parent=1 // pred_region
      %395 = dma.done [#allocation5], 128
    $region57: #{tpu_custom_call.1} parent=1 // pred_fallthru
      _
    %396 = vsyncpa [#allocation4], 1
    %397 = vsyncpa [#allocation7], 1
    %398 = vsyncpa [#allocation10], 1
    %399 = vsyncpa [#allocation5], 1

</llo_original>
